<compile_context>
chip_gen: v7x
topology: tpu7x:2x2x1
jax: 0.10.0
libtpu: 0.0.40
codegen_flags: <defaults>
</compile_context>

<pallas_src>
import jax
import jax.numpy as jnp
from jax.experimental import pallas as pl
from jax.experimental.pallas import tpu as pltpu


def splitadd_kernel(x_ref, w_ref, b_ref, o_ref):
    # x_ref: (1, C_in, HW)     channels-first tile of one batch element
    # w_ref: (P, C_out, C_in)  per-path 1x1-conv weights (resident in VMEM)
    # b_ref: (P, C_out, 1)     per-path biases
    # o_ref: (1, C_out, HW)    SplitAdd result for this batch element
    x = x_ref[0]                                   # (C_in, HW), lanes = HW

    # SplitAdd over linear paths fuses exactly:
    #   sum_p (W_p x + b_p) = (sum_p W_p) x + (sum_p b_p)
    w = jnp.sum(w_ref[...], axis=0)                # (C_out, C_in)
    b = jnp.sum(b_ref[...], axis=0)                # (C_out, 1)

    c_out, hw = o_ref.shape[1], o_ref.shape[2]
    acc = jnp.broadcast_to(b, (c_out, hw))         # bias once per tile

    # Unrolled VPU FMAs over C_in (K=4 is far too small to feed the MXU).
    for ci in range(x.shape[0]):
        acc = acc + w[:, ci:ci + 1] * x[ci:ci + 1, :]

    o_ref[0] = acc.astype(o_ref.dtype)


def split_add_forward(x_nchw, weights, biases):
    """x_nchw: (N, C_in, H, W); weights: (P, C_in, C_out); biases: (P, C_out)."""
    N, C_in, H, W = x_nchw.shape
    P, _, C_out = weights.shape
    HW = H * W

    # NCHW is already channels-first: a pure reshape gives (N, C_in, H*W); the
    # kernel output (N, C_out, H*W) reshapes straight back to NCHW.
    x3 = x_nchw.reshape(N, C_in, HW)
    w_t = jnp.transpose(weights, (0, 2, 1))        # (P, C_out, C_in)
    b3 = biases.reshape(P, C_out, 1)

    out3 = pl.pallas_call(
        splitadd_kernel,
        out_shape=jax.ShapeDtypeStruct((N, C_out, HW), jnp.float32),
        grid_spec=pltpu.PrefetchScalarGridSpec(
            num_scalar_prefetch=0,
            grid=(N,),
            in_specs=[
                pl.BlockSpec((1, C_in, HW), lambda n: (n, 0, 0)),
                pl.BlockSpec((P, C_out, C_in), lambda n: (0, 0, 0)),
                pl.BlockSpec((P, C_out, 1), lambda n: (0, 0, 0)),
            ],
            out_specs=pl.BlockSpec((1, C_out, HW), lambda n: (n, 0, 0)),
        ),
        compiler_params=pltpu.CompilerParams(
            dimension_semantics=("parallel",)),
    )(x3, w_t, b3)

    return out3.reshape(N, C_out, H, W)


def split_add_reference(x_nchw, weights, biases):
    """Pure-JAX reference matching: result = path_0(x); result += path_p(x)."""
    N, C_in, H, W = x_nchw.shape
    x_flat = jnp.transpose(x_nchw, (0, 2, 3, 1)).reshape(-1, C_in)
    out = None
    for p in range(weights.shape[0]):
        y = x_flat @ weights[p] + biases[p]
        out = y if out is None else out + y
    out = out.reshape(N, H, W, -1)
    return jnp.transpose(out, (0, 3, 1, 2))


if __name__ == "__main__":
    # TODO(synk): arbitrary user-supplied path modules are not handled
    # generically; this script instantiates SplitAdd with two 1x1-conv paths.
    N, C_in, H, W = 2, 4, 16, 16
    P, C_out = 2, 8

    key = jax.random.PRNGKey(0)
    kx, kw, kb = jax.random.split(key, 3)
    x = jax.random.normal(kx, (N, C_in, H, W), dtype=jnp.float32)
    weights = jax.random.normal(kw, (P, C_in, C_out), dtype=jnp.float32) * 0.1
    biases = jax.random.normal(kb, (P, C_out), dtype=jnp.float32) * 0.1

    out = split_add_forward(x, weights, biases)
    out = jax.block_until_ready(out)

    ref = split_add_reference(x, weights, biases)
    assert out.shape == (N, C_out, H, W), out.shape
    assert jnp.allclose(out, ref, atol=1e-5, rtol=1e-5), "mismatch vs reference"
    print("KERNEL_OK")
</pallas_src>

<mosaic_0001>
module attributes {stable_mosaic.version = 11 : i64} {
  func.func @splitadd_kernel(%arg0: i32, %arg1: memref<1x4x256xf32, #tpu.memory_space<vmem>>, %arg2: memref<2x8x4xf32, #tpu.memory_space<vmem>>, %arg3: memref<2x8x1xf32, #tpu.memory_space<vmem>>, %arg4: memref<1x8x256xf32, #tpu.memory_space<vmem>>) attributes {dimension_semantics = [#tpu.dimension_semantics<parallel>], iteration_bounds = array<i64: 2>, scalar_prefetch = 0 : i64, scratch_operands = 0 : i64, tpu.core_type = #tpu.core_type<tc>, window_params = [{transform_indices = @transform_0, window_bounds = array<i64: 1, 4, 256>}, {pipeline_mode = #tpu.pipeline_mode<synchronous>, transform_indices = @transform_1, window_bounds = array<i64: 2, 8, 4>}, {pipeline_mode = #tpu.pipeline_mode<synchronous>, transform_indices = @transform_2, window_bounds = array<i64: 2, 8, 1>}, {transform_indices = @transform_3, window_bounds = array<i64: 1, 8, 256>}]} {
    %c0 = arith.constant 0 : index
    %c0_0 = arith.constant 0 : index
    %c0_1 = arith.constant 0 : index
    %0 = vector.load %arg1[%c0, %c0_0, %c0_1] : memref<1x4x256xf32, #tpu.memory_space<vmem>>, vector<1x4x256xf32>
    %1 = vector.shape_cast %0 : vector<1x4x256xf32> to vector<4x256xf32>
    %c0_2 = arith.constant 0 : index
    %c0_3 = arith.constant 0 : index
    %c0_4 = arith.constant 0 : index
    %2 = vector.load %arg2[%c0_2, %c0_3, %c0_4] : memref<2x8x4xf32, #tpu.memory_space<vmem>>, vector<2x8x4xf32>
    %cst = arith.constant dense<0.000000e+00> : vector<8x4xf32>
    %3 = vector.multi_reduction <add>, %2, %cst [0] : vector<2x8x4xf32> to vector<8x4xf32>
    %c0_5 = arith.constant 0 : index
    %c0_6 = arith.constant 0 : index
    %c0_7 = arith.constant 0 : index
    %4 = vector.load %arg3[%c0_5, %c0_6, %c0_7] : memref<2x8x1xf32, #tpu.memory_space<vmem>>, vector<2x8x1xf32>
    %cst_8 = arith.constant dense<0.000000e+00> : vector<8x1xf32>
    %5 = vector.multi_reduction <add>, %4, %cst_8 [0] : vector<2x8x1xf32> to vector<8x1xf32>
    %6 = vector.shape_cast %5 : vector<8x1xf32> to vector<8x1xf32>
    %7 = vector.broadcast %6 : vector<8x1xf32> to vector<8x256xf32>
    %8 = vector.extract_strided_slice %3 {offsets = [0, 0], sizes = [8, 1], strides = [1, 1]} : vector<8x4xf32> to vector<8x1xf32>
    %9 = vector.extract_strided_slice %1 {offsets = [0, 0], sizes = [1, 256], strides = [1, 1]} : vector<4x256xf32> to vector<1x256xf32>
    %10 = vector.broadcast %8 : vector<8x1xf32> to vector<8x256xf32>
    %11 = vector.broadcast %9 : vector<1x256xf32> to vector<8x256xf32>
    %12 = arith.mulf %10, %11 : vector<8x256xf32>
    %13 = arith.addf %7, %12 : vector<8x256xf32>
    %14 = vector.extract_strided_slice %3 {offsets = [0, 1], sizes = [8, 1], strides = [1, 1]} : vector<8x4xf32> to vector<8x1xf32>
    %15 = vector.extract_strided_slice %1 {offsets = [1, 0], sizes = [1, 256], strides = [1, 1]} : vector<4x256xf32> to vector<1x256xf32>
    %16 = vector.broadcast %14 : vector<8x1xf32> to vector<8x256xf32>
    %17 = vector.broadcast %15 : vector<1x256xf32> to vector<8x256xf32>
    %18 = arith.mulf %16, %17 : vector<8x256xf32>
    %19 = arith.addf %13, %18 : vector<8x256xf32>
    %20 = vector.extract_strided_slice %3 {offsets = [0, 2], sizes = [8, 1], strides = [1, 1]} : vector<8x4xf32> to vector<8x1xf32>
    %21 = vector.extract_strided_slice %1 {offsets = [2, 0], sizes = [1, 256], strides = [1, 1]} : vector<4x256xf32> to vector<1x256xf32>
    %22 = vector.broadcast %20 : vector<8x1xf32> to vector<8x256xf32>
    %23 = vector.broadcast %21 : vector<1x256xf32> to vector<8x256xf32>
    %24 = arith.mulf %22, %23 : vector<8x256xf32>
    %25 = arith.addf %19, %24 : vector<8x256xf32>
    %26 = vector.extract_strided_slice %3 {offsets = [0, 3], sizes = [8, 1], strides = [1, 1]} : vector<8x4xf32> to vector<8x1xf32>
    %27 = vector.extract_strided_slice %1 {offsets = [3, 0], sizes = [1, 256], strides = [1, 1]} : vector<4x256xf32> to vector<1x256xf32>
    %28 = vector.broadcast %26 : vector<8x1xf32> to vector<8x256xf32>
    %29 = vector.broadcast %27 : vector<1x256xf32> to vector<8x256xf32>
    %30 = arith.mulf %28, %29 : vector<8x256xf32>
    %31 = arith.addf %25, %30 : vector<8x256xf32>
    %c0_9 = arith.constant 0 : index
    %c0_10 = arith.constant 0 : index
    %c0_11 = arith.constant 0 : index
    %32 = vector.load %arg4[%c0_9, %c0_10, %c0_11] : memref<1x8x256xf32, #tpu.memory_space<vmem>>, vector<1x8x256xf32>
    %33 = vector.shape_cast %32 : vector<1x8x256xf32> to vector<8x256xf32>
    %34 = vector.shape_cast %31 : vector<8x256xf32> to vector<1x8x256xf32>
    tpu.vector_store %arg4[%c0_9, %c0_10, %c0_11], %34 {strides = array<i32>} : memref<1x8x256xf32, #tpu.memory_space<vmem>>, vector<1x8x256xf32>,
    return
  }
  func.func @transform_0(%arg0: i32) -> (i32, i32, i32) {
    %c0_i32 = arith.constant 0 : i32
    %c0_i32_0 = arith.constant 0 : i32
    %c0_i32_1 = arith.constant 0 : i32
    return %arg0, %c0_i32, %c0_i32_0 : i32, i32, i32
  }
  func.func @transform_1(%arg0: i32) -> (i32, i32, i32) {
    %c0_i32 = arith.constant 0 : i32
    %c0_i32_0 = arith.constant 0 : i32
    %c0_i32_1 = arith.constant 0 : i32
    %c0_i32_2 = arith.constant 0 : i32
    return %c0_i32, %c0_i32_0, %c0_i32_1 : i32, i32, i32
  }
  func.func @transform_2(%arg0: i32) -> (i32, i32, i32) {
    %c0_i32 = arith.constant 0 : i32
    %c0_i32_0 = arith.constant 0 : i32
    %c0_i32_1 = arith.constant 0 : i32
    %c0_i32_2 = arith.constant 0 : i32
    return %c0_i32, %c0_i32_0, %c0_i32_1 : i32, i32, i32
  }
  func.func @transform_3(%arg0: i32) -> (i32, i32, i32) {
    %c0_i32 = arith.constant 0 : i32
    %c0_i32_0 = arith.constant 0 : i32
    %c0_i32_1 = arith.constant 0 : i32
    return %arg0, %c0_i32, %c0_i32_0 : i32, i32, i32
  }
}

</mosaic_0001>

<llo_original>
// kernel: tpu_custom_call.1
$region0: #{tpu_custom_call.1}
  #allocation0 [shape = 'u32[]', space=smem, size = 0x4, offset = 0x4, fixed_abs, tag = 'smem constant byte address 0x4 - core index']
  #allocation1 [shape = 'u32[144,128]{1,0:T(1,128)}', space=vmem, size = 0x12000, scoped, tag = 'internal scratch']
  %s0 = inlined_call_operand.vmem [shape: f32[2,4,256], index: 0, kind: input, shape index: {}]
  %s1 = inlined_call_operand.vmem [shape: f32[2,8,4], index: 1, kind: input, shape index: {}]
  %s2 = inlined_call_operand.vmem [shape: f32[2,8,1], index: 2, kind: input, shape index: {}]
  %s3 = inlined_call_operand.hbm [shape: f32[2,8,256], index: 3, kind: output, shape index: {}]
  %s4 = sld [smem:[#allocation0]]
  $region45: #{tpu_custom_call.1} parent=0
    _
  %s6 = ssub.s32 1, %s4
  %s7 = scalar_select 0, %s6, %s4
  $region1: #{tpu_custom_call.1} parent=0
    #allocation2 [shape = 'u8[16384]{0}', space=vmem, size = 0x4000, scoped, tag = 'output window, operand 0']
    #allocation3 [shape = 's32[2]{0}', space=sflag, size = 0x8, scoped, tag = 'scoped memory for tpu_custom_call.1']
    %8 = vsyncpa [#allocation3], 0
    %s9 = scalar_lea.sflag [#allocation3], 1
    %10 = vsyncpa %s9, 0
    loop: start=0, step=1, limit=4
    $region2: #{tpu_custom_call.1} parent=1 // loop_pre_header
      _
    $region3: #{tpu_custom_call.1} parent=1 // loop_header
      %s12 = sphi 0, %s16
      %p13 = scmp.ge.s32.totalorder %s12, 4
      %s22 = sphi 0, %s24
      %s25 = sphi 0, %s22
      %s26 = sphi 0, %s25
      %s42 = sphi 0, %s26
      %s46 = sphi 0, %s46
      %s48 = sphi 0, %s46
      %s49 = sphi 0, %s48
      %s63 = sphi 0, %s49
      %s67 = sphi 0, %s67
      %s69 = sphi 0, %s67
      %s70 = sphi 0, %s69
      %s84 = sphi 0, %s70
      %s90 = sphi 0, %s92
      %s93 = sphi 0, %s90
      %s94 = sphi 0, %s93
      %s110 = sphi 0, %s94
    $region4: #{tpu_custom_call.1} parent=1 // loop_header_branch
      %15 = sbr.rel (%p13) target = $region8
    $region5: #{tpu_custom_call.1} parent=1 // loop_body
      %s17 = ssub.s32 %s12, 1
      %s18 = ssub.s32 %s12, 2
      %s19 = sadd.s32 %s12, 1
      %s20 = ssub.s32 %s12, %s19
      %p21 = scmp.eq.s32.totalorder %s20, 0
      %s23 = sadd.s32 %s22, 1
      %s24 = scalar_select %p21, %s22, %s23
      %p27 = pneg %p21
      %p28 = scmp.eq.s32.totalorder %s12, 1
      %p29 = por %p27, %p28
      %p30 = scmp.ne.s32.totalorder %s22, %s25
      %p31 = scmp.eq.s32.totalorder %s12, 0
      %p32 = por %p30, %p31
      %p33 = scmp.ne.s32.totalorder %s22, %s25
      %p34 = scmp.eq.s32.totalorder %s17, 1
      %p35 = por %p33, %p34
      %p36 = scmp.ne.s32.totalorder %s25, %s26
      %p37 = scmp.eq.s32.totalorder %s17, 0
      %p38 = por %p36, %p37
      %p39 = scmp.ne.s32.totalorder %s25, %s26
      %p40 = scmp.eq.s32.totalorder %s18, 1
      %p41 = por %p39, %p40
      %p43 = scmp.ne.s32.totalorder %s26, %s42
      %p44 = scmp.eq.s32.totalorder %s18, 0
      %p45 = por %p43, %p44
      %s47 = sadd.s32 %s46, 1
      %p50 = scmp.eq.s32.totalorder %s12, 1
      %p51 = scmp.ne.s32.totalorder %s46, %s48
      %p52 = scmp.eq.s32.totalorder %s12, 0
      %p53 = por %p51, %p52
      %p54 = scmp.ne.s32.totalorder %s46, %s48
      %p55 = scmp.eq.s32.totalorder %s17, 1
      %p56 = por %p54, %p55
      %p57 = scmp.ne.s32.totalorder %s48, %s49
      %p58 = scmp.eq.s32.totalorder %s17, 0
      %p59 = por %p57, %p58
      %p60 = scmp.ne.s32.totalorder %s48, %s49
      %p61 = scmp.eq.s32.totalorder %s18, 1
      %p62 = por %p60, %p61
      %p64 = scmp.ne.s32.totalorder %s49, %s63
      %p65 = scmp.eq.s32.totalorder %s18, 0
      %p66 = por %p64, %p65
      %s68 = sadd.s32 %s67, 1
      %p71 = scmp.eq.s32.totalorder %s12, 1
      %p72 = scmp.ne.s32.totalorder %s67, %s69
      %p73 = scmp.eq.s32.totalorder %s12, 0
      %p74 = por %p72, %p73
      %p75 = scmp.ne.s32.totalorder %s67, %s69
      %p76 = scmp.eq.s32.totalorder %s17, 1
      %p77 = por %p75, %p76
      %p78 = scmp.ne.s32.totalorder %s69, %s70
      %p79 = scmp.eq.s32.totalorder %s17, 0
      %p80 = por %p78, %p79
      %p81 = scmp.ne.s32.totalorder %s69, %s70
      %p82 = scmp.eq.s32.totalorder %s18, 1
      %p83 = por %p81, %p82
      %p85 = scmp.ne.s32.totalorder %s70, %s84
      %p86 = scmp.eq.s32.totalorder %s18, 0
      %p87 = por %p85, %p86
      %s88 = ssub.s32 %s12, %s19
      %p89 = scmp.eq.s32.totalorder %s88, 0
      %s91 = sadd.s32 %s90, 1
      %s92 = scalar_select %p89, %s90, %s91
      %p95 = pneg %p89
      %p96 = scmp.eq.s32.totalorder %s12, 1
      %p97 = por %p95, %p96
      %p98 = scmp.ne.s32.totalorder %s90, %s93
      %p99 = scmp.eq.s32.totalorder %s12, 0
      %p100 = por %p98, %p99
      %p101 = scmp.ne.s32.totalorder %s90, %s93
      %p102 = scmp.eq.s32.totalorder %s17, 1
      %p103 = por %p101, %p102
      %p104 = scmp.ne.s32.totalorder %s93, %s94
      %p105 = scmp.eq.s32.totalorder %s17, 0
      %p106 = por %p104, %p105
      %p107 = scmp.ne.s32.totalorder %s93, %s94
      %p108 = scmp.eq.s32.totalorder %s18, 1
      %p109 = por %p107, %p108
      %p111 = scmp.ne.s32.totalorder %s94, %s110
      %p112 = scmp.eq.s32.totalorder %s18, 0
      %p113 = por %p111, %p112
      %p114 = scmp.le.s32.totalorder 1, %s12
      %p115 = scmp.lt.s32.totalorder %s12, 3
      %p116 = pnand %p114, %p115
      %p117 = pneg %p116
      // Predicated region
      $region9: #{tpu_custom_call.1} parent=5 // pred_check
        _
      $region10: #{tpu_custom_call.1} parent=5 // pred_check_branch
        %119 = sbr.rel (%p116) target = $region12
      $region11: #{tpu_custom_call.1} parent=5 // pred_region
        %s120 = ssub.s32 %s12, 1
        // Predicated region
        $region13: #{tpu_custom_call.1} parent=11 // pred_check
          %p121 = pneg %p59
        $region14: #{tpu_custom_call.1} parent=11 // pred_check_branch
          %123 = sbr.rel (%p121) target = $region16
        $region15: #{tpu_custom_call.1} parent=11 // pred_region
          _
        $region16: #{tpu_custom_call.1} parent=11 // pred_fallthru
          _
        // Predicated region
        $region17: #{tpu_custom_call.1} parent=11 // pred_check
          %p124 = pneg %p80
        $region18: #{tpu_custom_call.1} parent=11 // pred_check_branch
          %126 = sbr.rel (%p124) target = $region20
        $region19: #{tpu_custom_call.1} parent=11 // pred_region
          _
        $region20: #{tpu_custom_call.1} parent=11 // pred_fallthru
          _
      $region12: #{tpu_custom_call.1} parent=5 // pred_fallthru
        _
      %p127 = scmp.lt.s32.totalorder %s12, 2
      // Predicated region
      $region21: #{tpu_custom_call.1} parent=5 // pred_check
        %p128 = pneg %p127
      $region22: #{tpu_custom_call.1} parent=5 // pred_check_branch
        %130 = sbr.rel (%p128) target = $region24
      $region23: #{tpu_custom_call.1} parent=5 // pred_region
        // Predicated region
        $region25: #{tpu_custom_call.1} parent=23 // pred_check
          %p131 = pneg %p32
        $region26: #{tpu_custom_call.1} parent=23 // pred_check_branch
          %133 = sbr.rel (%p131) target = $region28
        $region27: #{tpu_custom_call.1} parent=23 // pred_region
          %p134 = scmp.lt.s32.totalorder %s12, 1
          %s135 = scalar_select %p134, %s12, 1
          %s136 = smul.addr %s135, 2
          %s137 = smul.addr %s136, 4
          %s138 = scalar_lea.vmem %s0, %s137
        $region28: #{tpu_custom_call.1} parent=23 // pred_fallthru
          _
      $region24: #{tpu_custom_call.1} parent=5 // pred_fallthru
        _
      %p139 = scmp.le.s32.totalorder 1, %s12
      %p140 = scmp.lt.s32.totalorder %s12, 3
      %p141 = pnand %p139, %p140
      %p142 = pneg %p141
      // Predicated region
      $region29: #{tpu_custom_call.1} parent=5 // pred_check
        _
      $region30: #{tpu_custom_call.1} parent=5 // pred_check_branch
        %144 = sbr.rel (%p141) target = $region32
      $region31: #{tpu_custom_call.1} parent=5 // pred_region
        %s145 = ssub.s32 %s12, 1
        %p146 = scmp.lt.s32.totalorder %s17, 1
        %s147 = scalar_select %p146, %s17, 1
        %s148 = smul.addr %s147, 2
        %s149 = smul.addr %s148, 4
        %s150 = scalar_lea.vmem %s0, %s149
        %p151 = pneg %p38
        %p152 = pneg %p35
        %p153 = pneg %p59
        %p154 = pneg %p56
        %p155 = pneg %p80
        %p156 = pneg %p77
        %p157 = pneg %p106
        %p158 = pneg %p103
        %s159 = sand.u32 %s93, 1
        %s160 = scalar_lea.sflag [#allocation3], %s159
        %s161 = sand.u32 %s93, 1
        %s162 = smul.addr %s161, 16
        %s163 = scalar_lea.vmem [#allocation2], %s162
        %p164 = scmp.lt.s32.totalorder %s17, 1
        %s165 = scalar_select %p164, %s17, 1
        %s166 = smul.addr %s165, 2
        %s167 = smul.addr %s166, 4
        %s168 = scalar_lea.vmem %s0, %s167
        %v169 = vld [vmem:[%s168] sm:$0xff]
        %v170 = vld [vmem:[%s1] sm:$0xff]
        %v171 = vld [vmem:[%s1 + $0x8] sm:$0xff]
        %vm172 = vcmask 31744
        %v173 = vsel %vm172, %v170, 0.0
        %v174 = vsel %vm172, %v171, 0.0
        %v175 = vadd.f32 %v173, %v174
        %v176 = vld [vmem:[%s2] sm:$0xff]
        %v177 = vld [vmem:[%s2 + $0x8] sm:$0xff]
        %vm178 = vcmask 7168
        %v179 = vsel %vm178, %v176, 0.0
        %v180 = vsel %vm178, %v177, 0.0
        %v181 = vadd.f32 %v179, %v180
        %183 = vset.pattern.permute.xlu0 0
        %184 = vperm.xlu0 %183, %v181
        %v185 = vpop.permute.xlu0 %184
        %188 = vset.pattern.permute.xlu0 0
        %189 = vperm.xlu0 %188, %v175
        %v190 = vpop.permute.xlu0 %189
        %v193 = vlaneseq
        %v194 = vshrl.u32 %v193, 7
        %v195 = vsub.s32 0, %v194
        %v196 = vrot.slane %v169, %v195
        %v197 = vlaneseq
        %v198 = vshrl.u32 %v197, 7
        %v199 = vsub.s32 4, %v198
        %v200 = vrot.slane %v169, %v199
        %v203 = vlaneseq
        %v204 = vshrl.u32 %v203, 7
        %v205 = vsub.s32 0, %v204
        %v206 = vrot.slane %v196, %v205
        %v207 = vlaneseq
        %v208 = vshrl.u32 %v207, 7
        %v209 = vsub.s32 0, %v208
        %v210 = vrot.slane %v200, %v209
        %v211 = vmul.f32 %v190, %v206
        %v212 = vmul.f32 %v190, %v210
        %v213 = vadd.f32 %v185, %v211
        %v214 = vadd.f32 %v185, %v212
        %215 = vset.pattern.permute.xlu0 1
        %216 = vperm.xlu0 %215, %v175
        %v217 = vpop.permute.xlu0 %216
        %v219 = vlaneseq
        %v220 = vshrl.u32 %v219, 7
        %v221 = vsub.s32 1, %v220
        %v222 = vrot.slane %v169, %v221
        %v223 = vlaneseq
        %v224 = vshrl.u32 %v223, 7
        %v225 = vsub.s32 5, %v224
        %v226 = vrot.slane %v169, %v225
        %v229 = vlaneseq
        %v230 = vshrl.u32 %v229, 7
        %v231 = vsub.s32 1, %v230
        %v232 = vrot.slane %v222, %v231
        %v233 = vlaneseq
        %v234 = vshrl.u32 %v233, 7
        %v235 = vsub.s32 1, %v234
        %v236 = vrot.slane %v226, %v235
        %v237 = vmul.f32 %v217, %v232
        %v238 = vmul.f32 %v217, %v236
        %v239 = vadd.f32 %v213, %v237
        %v240 = vadd.f32 %v214, %v238
        %241 = vset.pattern.permute.xlu0 2
        %242 = vperm.xlu0 %241, %v175
        %v243 = vpop.permute.xlu0 %242
        %v245 = vlaneseq
        %v246 = vshrl.u32 %v245, 7
        %v247 = vsub.s32 2, %v246
        %v248 = vrot.slane %v169, %v247
        %v249 = vlaneseq
        %v250 = vshrl.u32 %v249, 7
        %v251 = vsub.s32 6, %v250
        %v252 = vrot.slane %v169, %v251
        %v255 = vlaneseq
        %v256 = vshrl.u32 %v255, 7
        %v257 = vsub.s32 2, %v256
        %v258 = vrot.slane %v248, %v257
        %v259 = vlaneseq
        %v260 = vshrl.u32 %v259, 7
        %v261 = vsub.s32 2, %v260
        %v262 = vrot.slane %v252, %v261
        %v263 = vmul.f32 %v243, %v258
        %v264 = vmul.f32 %v243, %v262
        %v265 = vadd.f32 %v239, %v263
        %v266 = vadd.f32 %v240, %v264
        %267 = vset.pattern.permute.xlu0 3
        %268 = vperm.xlu0 %267, %v175
        %v269 = vpop.permute.xlu0 %268
        %v271 = vlaneseq
        %v272 = vshrl.u32 %v271, 7
        %v273 = vsub.s32 3, %v272
        %v274 = vrot.slane %v169, %v273
        %v275 = vlaneseq
        %v276 = vshrl.u32 %v275, 7
        %v277 = vsub.s32 7, %v276
        %v278 = vrot.slane %v169, %v277
        %v281 = vlaneseq
        %v282 = vshrl.u32 %v281, 7
        %v283 = vsub.s32 3, %v282
        %v284 = vrot.slane %v274, %v283
        %v285 = vlaneseq
        %v286 = vshrl.u32 %v285, 7
        %v287 = vsub.s32 3, %v286
        %v288 = vrot.slane %v278, %v287
        %v289 = vmul.f32 %v269, %v284
        %v290 = vmul.f32 %v269, %v288
        %v291 = vadd.f32 %v265, %v289
        %v292 = vadd.f32 %v266, %v290
        %293 = vst [vmem:[%s163] sm:$0xff] %v291
        %294 = vst [vmem:[%s163 + $0x8] sm:$0xff] %v292
        %s295 = sand.u32 %s93, 1
        %s296 = scalar_lea.sflag [#allocation3], %s295
        %s297 = sand.u32 %s93, 1
        %s298 = smul.addr %s297, 16
        %s299 = scalar_lea.vmem [#allocation2], %s298
        // Predicated region
        $region33: #{tpu_custom_call.1} parent=31 // pred_check
          %p300 = pneg %p103
        $region34: #{tpu_custom_call.1} parent=31 // pred_check_branch
          %302 = sbr.rel (%p300) target = $region36
        $region35: #{tpu_custom_call.1} parent=31 // pred_region
          %s304 = ssub.s32 256, 256
          %305 = vsyncadd %s296, %s304
          %s306 = smul.addr %s17, 2
          %s307 = smul.addr %s306, 128
          %s308 = scalar_lea.hbm %s3, %s307
          %s310 = sshll.u32 %s299, 4
          %s311 = int_to_ptr.vmem [resolvable:$true] %s310
          %313 = dma.vmem_to_hbm [thread:$0]  %s311, 256, %s308, %s296
        $region36: #{tpu_custom_call.1} parent=31 // pred_fallthru
          _
      $region32: #{tpu_custom_call.1} parent=5 // pred_fallthru
        _
      %p314 = scmp.le.s32.totalorder 2, %s12
      // Predicated region
      $region37: #{tpu_custom_call.1} parent=5 // pred_check
        %p315 = pneg %p314
      $region38: #{tpu_custom_call.1} parent=5 // pred_check_branch
        %317 = sbr.rel (%p315) target = $region40
      $region39: #{tpu_custom_call.1} parent=5 // pred_region
        %s318 = ssub.s32 %s12, 2
        // Predicated region
        $region41: #{tpu_custom_call.1} parent=39 // pred_check
          %p319 = pneg %p109
        $region42: #{tpu_custom_call.1} parent=39 // pred_check_branch
          %321 = sbr.rel (%p319) target = $region44
        $region43: #{tpu_custom_call.1} parent=39 // pred_region
          %s322 = sand.u32 %s94, 1
          %s323 = scalar_lea.sflag [#allocation3], %s322
          %s324 = sand.u32 %s94, 1
          %s325 = smul.addr %s324, 16
          %s326 = scalar_lea.vmem [#allocation2], %s325
          %327 = dma.done %s323, 256
        $region44: #{tpu_custom_call.1} parent=39 // pred_fallthru
          _
      $region40: #{tpu_custom_call.1} parent=5 // pred_fallthru
        _
    $region6: #{tpu_custom_call.1} parent=1 // loop_footer
      %s16 = sadd.s32 1, %s12
    $region7: #{tpu_custom_call.1} parent=1 // loop_footer_branch
      %11 = sbr.rel target = $region3
    $region8: #{tpu_custom_call.1} parent=1 // loop_exit
      _
    %328 = vsyncpa [#allocation3], 1
    %s329 = scalar_lea.sflag [#allocation3], 1
    %330 = vsyncpa %s329, 1

</llo_original>
